<compile_context>
chip_gen: v5e
topology: v5e:2x2
jax: 0.10.0
libtpu: 0.0.40
codegen_flags: <defaults>
</compile_context>

<pallas_src>
import functools

import jax
import jax.numpy as jnp
from jax import lax
from jax.experimental import pallas as pl
from jax.experimental.pallas import tpu as pltpu


# A (rows, 1) int32/f32 VMEM block lane-pads to (8,128) tiles: 512 bytes per row.
_LANE_PADDED_ROW_BYTES = 512
# Double-buffered streaming budget (logits + labels). 24 MiB keeps the whole
# pipeline (2x logits, 2x labels, outputs, scratch) under the 48 MiB scoped limit,
# which itself respects v7x's 64 MiB physical VMEM; v5e/v6e have ample headroom.
_DEFAULT_BUDGET_BYTES = 24 * 1024 * 1024
_VMEM_LIMIT_BYTES = 48 * 1024 * 1024


def _floor8(x):
    return max(8, (int(x) // 8) * 8)


def _ceil8(x):
    return ((int(x) + 7) // 8) * 8


# --------------------------------------------------------------------------- #
# Path A: full-row tiles (classes fit in VMEM).  Grid: (row_tiles,) parallel.  #
# --------------------------------------------------------------------------- #
def _ce_rowtile_kernel(logits_ref, labels_ref, out_ref, *, tile_m, n_total):
    """Partial cross-entropy sum for rows [i*tile_m, (i+1)*tile_m)."""
    i = pl.program_id(0)
    row0 = i * tile_m

    logits = logits_ref[...].astype(jnp.float32)                 # (TM, C)
    labels = labels_ref[...]                                     # (TM, 1) int32

    m = jnp.max(logits, axis=-1, keepdims=True)                  # (TM, 1)
    s = logits - m                                               # (TM, C)
    sumexp = jnp.sum(jnp.exp(s), axis=-1, keepdims=True)         # (TM, 1)
    col = lax.broadcasted_iota(jnp.int32, s.shape, 1)
    picked = jnp.sum(jnp.where(col == labels, s, 0.0),
                     axis=-1, keepdims=True)                     # (TM, 1)
    per_row = jnp.log(sumexp) - picked                           # -log p[label]

    # Mask rows past the true batch (remainder tile). Garbage/NaN in padded rows
    # is per-row isolated and replaced with 0 before the tile sum.
    row = row0 + lax.broadcasted_iota(jnp.int32, per_row.shape, 0)
    per_row = jnp.where(row < n_total, per_row, 0.0)
    partial = jnp.sum(per_row)

    # Lane-dense unmasked (8,128) store: partial at [0,0], zeros elsewhere.
    r = lax.broadcasted_iota(jnp.int32, (8, 128), 0)
    cc = lax.broadcasted_iota(jnp.int32, (8, 128), 1)
    out_ref[...] = jnp.where((r == 0) & (cc == 0), partial, 0.0)


def _ce_row_tiled(predicts, labels, *, tile_m, budget_bytes):
    n, c = predicts.shape
    itemsize = predicts.dtype.itemsize

    if n < 8:
        tile_m = n                               # block == full array dim (allowed)
    else:
        if tile_m is None:
            # Dtype-aware budget: double-buffered logits row + lane-padded labels row.
            per_row = 2 * (c * itemsize + _LANE_PADDED_ROW_BYTES)
            tm_budget = _floor8(budget_bytes // per_row)
            tm_split = _ceil8(-(-n // 2))        # ~half the batch -> >=2 tiles (v7x megacore)
            tile_m = min(tm_budget, tm_split)
        tile_m = max(8, min((tile_m // 8) * 8, (n // 8) * 8))

    num_tiles = pl.cdiv(n, tile_m)
    n_pad = num_tiles * tile_m
    labels2d = jnp.zeros((n_pad, 1), jnp.int32).at[:n, 0].set(labels)

    cost = pl.CostEstimate(
        flops=5 * n * c,
        transcendentals=n * c,
        bytes_accessed=n * c * itemsize + n_pad * 4 + num_tiles * 8 * 128 * 4,
    )

    partials = pl.pallas_call(
        functools.partial(_ce_rowtile_kernel, tile_m=tile_m, n_total=n),
        out_shape=jax.ShapeDtypeStruct((num_tiles * 8, 128), jnp.float32),
        grid_spec=pltpu.PrefetchScalarGridSpec(
            num_scalar_prefetch=0,
            grid=(num_tiles,),
            in_specs=[
                pl.BlockSpec((tile_m, c), lambda i: (i, 0)),
                # Per-tile labels block: tiny, double-buffered, hidden under logits DMA.
                pl.BlockSpec((tile_m, 1), lambda i: (i, 0)),
            ],
            out_specs=pl.BlockSpec((8, 128), lambda i: (i, 0)),
        ),
        compiler_params=pltpu.CompilerParams(
            dimension_semantics=("parallel",),   # independent tiles -> megacore on v7x
            vmem_limit_bytes=_VMEM_LIMIT_BYTES,
        ),
        cost_estimate=cost,
    )(predicts, labels2d)

    # Final tree-reduce + mean over the tiny per-tile partials in the wrapper.
    return jnp.sum(partials) / jnp.float32(n)


# --------------------------------------------------------------------------- #
# Path B: C-tiled online softmax for vocab-scale class counts.                 #
# Grid: (row_tiles, c_tiles) with C last and "arbitrary".                      #
# --------------------------------------------------------------------------- #
def _ce_ctile_kernel(logits_ref, labels_ref, out_ref, m_sc, l_sc, p_sc,
                     *, tile_m, tile_c, n_total, c_total):
    i = pl.program_id(0)
    k = pl.program_id(1)
    row0 = i * tile_m
    col0 = k * tile_c

    @pl.when(k == 0)
    def _():
        m_sc[...] = jnp.full_like(m_sc, -jnp.inf)
        l_sc[...] = jnp.zeros_like(l_sc)
        p_sc[...] = jnp.zeros_like(p_sc)

    logits = logits_ref[...].astype(jnp.float32)                 # (TM, TC)
    labels = labels_ref[...]                                     # (TM, 1) int32
    col = col0 + lax.broadcasted_iota(jnp.int32, logits.shape, 1)
    x = jnp.where(col < c_total, logits, -jnp.inf)               # mask padded C columns

    m_prev = m_sc[...]                                           # (TM, 1)
    m_new = jnp.maximum(m_prev, jnp.max(x, axis=-1, keepdims=True))
    l_sc[...] = (l_sc[...] * jnp.exp(m_prev - m_new)
                 + jnp.sum(jnp.exp(x - m_new), axis=-1, keepdims=True))
    # Raw logit at the label column (labels < c_total, so always a valid column).
    p_sc[...] = p_sc[...] + jnp.sum(jnp.where(col == labels, x, 0.0),
                                    axis=-1, keepdims=True)
    m_sc[...] = m_new

    @pl.when(k == pl.num_programs(1) - 1)
    def _():
        per_row = jnp.log(l_sc[...]) + m_sc[...] - p_sc[...]     # (TM, 1)
        row = row0 + lax.broadcasted_iota(jnp.int32, per_row.shape, 0)
        per_row = jnp.where(row < n_total, per_row, 0.0)
        partial = jnp.sum(per_row)
        r = lax.broadcasted_iota(jnp.int32, (8, 128), 0)
        cc = lax.broadcasted_iota(jnp.int32, (8, 128), 1)
        out_ref[...] = jnp.where((r == 0) & (cc == 0), partial, 0.0)


def _ce_c_tiled(predicts, labels, *, tile_m, tile_c, budget_bytes):
    n, c = predicts.shape
    itemsize = predicts.dtype.itemsize

    if tile_m is None:
        tile_m = 8
    if n < 8:
        tile_m = n
    else:
        tile_m = max(8, min((tile_m // 8) * 8, (n // 8) * 8))

    if tile_c is None:
        tile_c = int(budget_bytes // (2 * tile_m * itemsize))
    if tile_c >= c or c < 128:
        tile_c = c                                   # full-width block (any C allowed)
    else:
        tile_c = max(128, (tile_c // 128) * 128)     # tiled blocks must be 128-multiples

    num_row_tiles = pl.cdiv(n, tile_m)
    num_c_tiles = pl.cdiv(c, tile_c)
    n_pad = num_row_tiles * tile_m
    labels2d = jnp.zeros((n_pad, 1), jnp.int32).at[:n, 0].set(labels)

    cost = pl.CostEstimate(
        flops=7 * n * c,
        transcendentals=n * c,
        bytes_accessed=n * c * itemsize + n_pad * 4 + num_row_tiles * 8 * 128 * 4,
    )

    partials = pl.pallas_call(
        functools.partial(_ce_ctile_kernel, tile_m=tile_m, tile_c=tile_c,
                          n_total=n, c_total=c),
        out_shape=jax.ShapeDtypeStruct((num_row_tiles * 8, 128), jnp.float32),
        grid_spec=pltpu.PrefetchScalarGridSpec(
            num_scalar_prefetch=0,
            grid=(num_row_tiles, num_c_tiles),
            in_specs=[
                pl.BlockSpec((tile_m, tile_c), lambda i, k: (i, k)),
                # Labels block constant across k -> fetched once per row tile.
                pl.BlockSpec((tile_m, 1), lambda i, k: (i, 0)),
            ],
            out_specs=pl.BlockSpec((8, 128), lambda i, k: (i, 0)),
            scratch_shapes=[pltpu.VMEM((tile_m, 1), jnp.float32)] * 3,
        ),
        compiler_params=pltpu.CompilerParams(
            dimension_semantics=("parallel", "arbitrary"),
            vmem_limit_bytes=_VMEM_LIMIT_BYTES,
        ),
        cost_estimate=cost,
    )(predicts, labels2d)

    return jnp.sum(partials) / jnp.float32(n)


# --------------------------------------------------------------------------- #
# Public wrapper (BatchFlipLoss(nce=0).forward equivalent).                    #
# --------------------------------------------------------------------------- #
def batch_flip_loss(predicts, labels, features=None, indexs=None, *,
                    tile_m=None, tile_c=None,
                    budget_bytes=_DEFAULT_BUDGET_BYTES):
    """Equivalent of BatchFlipLoss(nce=0).forward((predicts, labels, features), indexs).

    `features` / `indexs` accepted for interface parity; unused on the nce=0 path.
    """
    del features, indexs
    n, c = predicts.shape
    itemsize = predicts.dtype.itemsize
    labels = labels.astype(jnp.int32)

    # C-tiled online-softmax fallback when even an 8-row, full-width,
    # double-buffered tile would blow the VMEM budget (vocab-scale C), or when forced.
    needs_c_tiling = 2 * 8 * c * itemsize > budget_bytes
    if needs_c_tiling or tile_c is not None:
        return _ce_c_tiled(predicts, labels, tile_m=tile_m, tile_c=tile_c,
                           budget_bytes=budget_bytes)
    return _ce_row_tiled(predicts, labels, tile_m=tile_m, budget_bytes=budget_bytes)


def _reference(predicts, labels):
    logp = jax.nn.log_softmax(predicts.astype(jnp.float32), axis=-1)
    return -jnp.mean(
        jnp.take_along_axis(logp, labels.astype(jnp.int32)[:, None], axis=-1))


if __name__ == "__main__":
    key = jax.random.PRNGKey(0)
    k1, k2, k3, k4, k5 = jax.random.split(key, 5)

    # --- Row-tile path (flip_num-aligned batch, modest class count) ---
    N, C, D = 32, 128, 128
    predicts = jax.random.normal(k1, (N, C), dtype=jnp.float32)
    labels = jax.random.randint(k2, (N,), 0, C, dtype=jnp.int32)
    features = jax.random.normal(k3, (N, D), dtype=jnp.float32)    # unused (nce=0)
    indexs = jnp.arange(N // 8, dtype=jnp.int32)                   # unused (nce=0)

    loss = batch_flip_loss(predicts, labels, features, indexs)     # auto tile -> 2 tiles
    loss = jax.block_until_ready(loss)
    ref = _reference(predicts, labels)
    assert jnp.allclose(loss, ref, atol=1e-5, rtol=1e-5), (loss, ref)

    # --- C-tiled online-softmax fallback (forced via small tile_c at test scale) ---
    N2, C2 = 16, 256
    predicts2 = jax.random.normal(k4, (N2, C2), dtype=jnp.float32)
    labels2 = jax.random.randint(k5, (N2,), 0, C2, dtype=jnp.int32)
    loss2 = batch_flip_loss(predicts2, labels2, tile_m=8, tile_c=128)
    loss2 = jax.block_until_ready(loss2)
    ref2 = _reference(predicts2, labels2)
    assert jnp.allclose(loss2, ref2, atol=1e-5, rtol=1e-5), (loss2, ref2)

    print("KERNEL_OK")
</pallas_src>

<mosaic_0001>
module attributes {stable_mosaic.version = 11 : i64} {
  func.func @_ce_rowtile_kernel(%arg0: i32, %arg1: memref<16x128xf32, #tpu.memory_space<vmem>>, %arg2: memref<16x1xi32, #tpu.memory_space<vmem>>, %arg3: memref<8x128xf32, #tpu.memory_space<vmem>>) attributes {dimension_semantics = [#tpu.dimension_semantics<parallel>], iteration_bounds = array<i64: 2>, scalar_prefetch = 0 : i64, scratch_operands = 0 : i64, tpu.core_type = #tpu.core_type<tc>, window_params = [{transform_indices = @transform_0, window_bounds = array<i64: 16, 128>}, {transform_indices = @transform_1, window_bounds = array<i64: 16, 1>}, {transform_indices = @transform_2, window_bounds = array<i64: 8, 128>}]} {
    %c16_i32 = arith.constant 16 : i32
    %0 = arith.muli %arg0, %c16_i32 : i32
    %c0 = arith.constant 0 : index
    %c0_0 = arith.constant 0 : index
    %1 = vector.load %arg1[%c0, %c0_0] : memref<16x128xf32, #tpu.memory_space<vmem>>, vector<16x128xf32>
    %c0_1 = arith.constant 0 : index
    %c0_2 = arith.constant 0 : index
    %2 = vector.load %arg2[%c0_1, %c0_2] : memref<16x1xi32, #tpu.memory_space<vmem>>, vector<16x1xi32>
    %cst = arith.constant dense<0xFF800000> : vector<16xf32>
    %3 = vector.multi_reduction <maximumf>, %1, %cst [1] : vector<16x128xf32> to vector<16xf32>
    %4 = vector.shape_cast %3 : vector<16xf32> to vector<16x1xf32>
    %5 = vector.broadcast %4 : vector<16x1xf32> to vector<16x128xf32>
    %6 = arith.subf %1, %5 : vector<16x128xf32>
    %7 = math.exp %6 : vector<16x128xf32>
    %cst_3 = arith.constant dense<0.000000e+00> : vector<16xf32>
    %8 = vector.multi_reduction <add>, %7, %cst_3 [1] : vector<16x128xf32> to vector<16xf32>
    %9 = vector.shape_cast %8 : vector<16xf32> to vector<16x1xf32>
    %10 = tpu.iota {dimensions = array<i32: 1>} : vector<16x128xi32>
    %11 = vector.broadcast %2 : vector<16x1xi32> to vector<16x128xi32>
    %12 = arith.cmpi eq, %10, %11 : vector<16x128xi32>
    %cst_4 = arith.constant 0.000000e+00 : f32
    %13 = vector.broadcast %cst_4 : f32 to vector<16x128xf32>
    %14 = arith.select %12, %6, %13 : vector<16x128xi1>, vector<16x128xf32>
    %cst_5 = arith.constant dense<0.000000e+00> : vector<16xf32>
    %15 = vector.multi_reduction <add>, %14, %cst_5 [1] : vector<16x128xf32> to vector<16xf32>
    %16 = vector.shape_cast %15 : vector<16xf32> to vector<16x1xf32>
    %17 = math.log %9 : vector<16x1xf32>
    %18 = arith.subf %17, %16 : vector<16x1xf32>
    %19 = tpu.iota {dimensions = array<i32: 0>} : vector<16x1xi32>
    %20 = vector.broadcast %0 : i32 to vector<16x1xi32>
    %21 = arith.addi %20, %19 : vector<16x1xi32>
    %c32_i32 = arith.constant 32 : i32
    %22 = vector.broadcast %c32_i32 : i32 to vector<16x1xi32>
    %23 = arith.cmpi slt, %21, %22 : vector<16x1xi32>
    %cst_6 = arith.constant 0.000000e+00 : f32
    %24 = vector.broadcast %cst_6 : f32 to vector<16x1xf32>
    %25 = arith.select %23, %18, %24 : vector<16x1xi1>, vector<16x1xf32>
    %26 = vector.shape_cast %25 : vector<16x1xf32> to vector<1x16x1xf32>
    %cst_7 = arith.constant dense<0.000000e+00> : vector<1xf32>
    %27 = vector.multi_reduction <add>, %26, %cst_7 [1, 2] : vector<1x16x1xf32> to vector<1xf32>
    %28 = vector.shape_cast %27 : vector<1xf32> to vector<1x1x1xf32>
    %29 = vector.extract %28[0, 0, 0] : f32 from vector<1x1x1xf32>
    %30 = tpu.iota {dimensions = array<i32: 0>} : vector<8x128xi32>
    %31 = tpu.iota {dimensions = array<i32: 1>} : vector<8x128xi32>
    %c0_i32 = arith.constant 0 : i32
    %32 = vector.broadcast %c0_i32 : i32 to vector<8x128xi32>
    %33 = arith.cmpi eq, %30, %32 : vector<8x128xi32>
    %c0_i32_8 = arith.constant 0 : i32
    %34 = vector.broadcast %c0_i32_8 : i32 to vector<8x128xi32>
    %35 = arith.cmpi eq, %31, %34 : vector<8x128xi32>
    %36 = arith.andi %33, %35 : vector<8x128xi1>
    %cst_9 = arith.constant 0.000000e+00 : f32
    %37 = vector.broadcast %29 : f32 to vector<8x128xf32>
    %38 = vector.broadcast %cst_9 : f32 to vector<8x128xf32>
    %39 = arith.select %36, %37, %38 : vector<8x128xi1>, vector<8x128xf32>
    %c0_10 = arith.constant 0 : index
    %c0_11 = arith.constant 0 : index
    %40 = vector.load %arg3[%c0_10, %c0_11] : memref<8x128xf32, #tpu.memory_space<vmem>>, vector<8x128xf32>
    tpu.vector_store %arg3[%c0_10, %c0_11], %39 {strides = array<i32>} : memref<8x128xf32, #tpu.memory_space<vmem>>, vector<8x128xf32>,
    return
  }
  func.func @transform_0(%arg0: i32) -> (i32, i32) {
    %c0_i32 = arith.constant 0 : i32
    %c0_i32_0 = arith.constant 0 : i32
    return %arg0, %c0_i32 : i32, i32
  }
  func.func @transform_1(%arg0: i32) -> (i32, i32) {
    %c0_i32 = arith.constant 0 : i32
    %c0_i32_0 = arith.constant 0 : i32
    return %arg0, %c0_i32 : i32, i32
  }
  func.func @transform_2(%arg0: i32) -> (i32, i32) {
    %c0_i32 = arith.constant 0 : i32
    %c0_i32_0 = arith.constant 0 : i32
    return %arg0, %c0_i32 : i32, i32
  }
}

</mosaic_0001>

<llo_original>
// kernel: tpu_custom_call.1
$region0: #{tpu_custom_call.1}
  #allocation0 [shape = 'u32[]', space=smem, size = 0x4, offset = 0x4, fixed_abs, tag = 'smem constant byte address 0x4 - core index']
  #allocation1 [shape = 'u32[72,128]{1,0:T(1,128)}', space=vmem, size = 0x9000, scoped, tag = 'internal scratch']
  %s0 = inlined_call_operand.vmem [shape: f32[32,128], index: 0, kind: input, shape index: {}]
  %s1 = inlined_call_operand.vmem [shape: s32[32,1], index: 1, kind: input, shape index: {}]
  %s2 = inlined_call_operand.hbm [shape: f32[16,128], index: 2, kind: output, shape index: {}]
  %s3 = sld [smem:[#allocation0]]
  $region41: #{tpu_custom_call.1} parent=0
    _
  %s5 = ssub.s32 1, %s3
  %s6 = scalar_select 0, %s5, %s3
  $region1: #{tpu_custom_call.1} parent=0
    #allocation2 [shape = 'u8[8192]{0}', space=vmem, size = 0x2000, scoped, tag = 'output window, operand 0']
    #allocation3 [shape = 's32[2]{0}', space=sflag, size = 0x8, scoped, tag = 'scoped memory for tpu_custom_call.1']
    %7 = vsyncpa [#allocation3], 0
    %s8 = scalar_lea.sflag [#allocation3], 1
    %9 = vsyncpa %s8, 0
    loop: start=0, step=1, limit=4
    $region2: #{tpu_custom_call.1} parent=1 // loop_pre_header
      _
    $region3: #{tpu_custom_call.1} parent=1 // loop_header
      %s11 = sphi 0, %s15
      %p12 = scmp.ge.s32.totalorder %s11, 4
      %s21 = sphi 0, %s23
      %s24 = sphi 0, %s21
      %s25 = sphi 0, %s24
      %s41 = sphi 0, %s25
      %s47 = sphi 0, %s49
      %s50 = sphi 0, %s47
      %s51 = sphi 0, %s50
      %s67 = sphi 0, %s51
      %s73 = sphi 0, %s75
      %s76 = sphi 0, %s73
      %s77 = sphi 0, %s76
      %s93 = sphi 0, %s77
    $region4: #{tpu_custom_call.1} parent=1 // loop_header_branch
      %14 = sbr.rel (%p12) target = $region8
    $region5: #{tpu_custom_call.1} parent=1 // loop_body
      %s16 = ssub.s32 %s11, 1
      %s17 = ssub.s32 %s11, 2
      %s18 = sadd.s32 %s11, 1
      %s19 = ssub.s32 %s11, %s18
      %p20 = scmp.eq.s32.totalorder %s19, 0
      %s22 = sadd.s32 %s21, 1
      %s23 = scalar_select %p20, %s21, %s22
      %p26 = pneg %p20
      %p27 = scmp.eq.s32.totalorder %s11, 1
      %p28 = por %p26, %p27
      %p29 = scmp.ne.s32.totalorder %s21, %s24
      %p30 = scmp.eq.s32.totalorder %s11, 0
      %p31 = por %p29, %p30
      %p32 = scmp.ne.s32.totalorder %s21, %s24
      %p33 = scmp.eq.s32.totalorder %s16, 1
      %p34 = por %p32, %p33
      %p35 = scmp.ne.s32.totalorder %s24, %s25
      %p36 = scmp.eq.s32.totalorder %s16, 0
      %p37 = por %p35, %p36
      %p38 = scmp.ne.s32.totalorder %s24, %s25
      %p39 = scmp.eq.s32.totalorder %s17, 1
      %p40 = por %p38, %p39
      %p42 = scmp.ne.s32.totalorder %s25, %s41
      %p43 = scmp.eq.s32.totalorder %s17, 0
      %p44 = por %p42, %p43
      %s45 = ssub.s32 %s11, %s18
      %p46 = scmp.eq.s32.totalorder %s45, 0
      %s48 = sadd.s32 %s47, 1
      %s49 = scalar_select %p46, %s47, %s48
      %p52 = pneg %p46
      %p53 = scmp.eq.s32.totalorder %s11, 1
      %p54 = por %p52, %p53
      %p55 = scmp.ne.s32.totalorder %s47, %s50
      %p56 = scmp.eq.s32.totalorder %s11, 0
      %p57 = por %p55, %p56
      %p58 = scmp.ne.s32.totalorder %s47, %s50
      %p59 = scmp.eq.s32.totalorder %s16, 1
      %p60 = por %p58, %p59
      %p61 = scmp.ne.s32.totalorder %s50, %s51
      %p62 = scmp.eq.s32.totalorder %s16, 0
      %p63 = por %p61, %p62
      %p64 = scmp.ne.s32.totalorder %s50, %s51
      %p65 = scmp.eq.s32.totalorder %s17, 1
      %p66 = por %p64, %p65
      %p68 = scmp.ne.s32.totalorder %s51, %s67
      %p69 = scmp.eq.s32.totalorder %s17, 0
      %p70 = por %p68, %p69
      %s71 = ssub.s32 %s11, %s18
      %p72 = scmp.eq.s32.totalorder %s71, 0
      %s74 = sadd.s32 %s73, 1
      %s75 = scalar_select %p72, %s73, %s74
      %p78 = pneg %p72
      %p79 = scmp.eq.s32.totalorder %s11, 1
      %p80 = por %p78, %p79
      %p81 = scmp.ne.s32.totalorder %s73, %s76
      %p82 = scmp.eq.s32.totalorder %s11, 0
      %p83 = por %p81, %p82
      %p84 = scmp.ne.s32.totalorder %s73, %s76
      %p85 = scmp.eq.s32.totalorder %s16, 1
      %p86 = por %p84, %p85
      %p87 = scmp.ne.s32.totalorder %s76, %s77
      %p88 = scmp.eq.s32.totalorder %s16, 0
      %p89 = por %p87, %p88
      %p90 = scmp.ne.s32.totalorder %s76, %s77
      %p91 = scmp.eq.s32.totalorder %s17, 1
      %p92 = por %p90, %p91
      %p94 = scmp.ne.s32.totalorder %s77, %s93
      %p95 = scmp.eq.s32.totalorder %s17, 0
      %p96 = por %p94, %p95
      %p97 = scmp.le.s32.totalorder 1, %s11
      %p98 = scmp.lt.s32.totalorder %s11, 3
      %p99 = pnand %p97, %p98
      %p100 = pneg %p99
      // Predicated region
      $region9: #{tpu_custom_call.1} parent=5 // pred_check
        _
      $region10: #{tpu_custom_call.1} parent=5 // pred_check_branch
        %102 = sbr.rel (%p99) target = $region12
      $region11: #{tpu_custom_call.1} parent=5 // pred_region
        %s103 = ssub.s32 %s11, 1
      $region12: #{tpu_custom_call.1} parent=5 // pred_fallthru
        _
      %p104 = scmp.lt.s32.totalorder %s11, 2
      // Predicated region
      $region13: #{tpu_custom_call.1} parent=5 // pred_check
        %p105 = pneg %p104
      $region14: #{tpu_custom_call.1} parent=5 // pred_check_branch
        %107 = sbr.rel (%p105) target = $region16
      $region15: #{tpu_custom_call.1} parent=5 // pred_region
        // Predicated region
        $region17: #{tpu_custom_call.1} parent=15 // pred_check
          %p108 = pneg %p31
        $region18: #{tpu_custom_call.1} parent=15 // pred_check_branch
          %110 = sbr.rel (%p108) target = $region20
        $region19: #{tpu_custom_call.1} parent=15 // pred_region
          %s111 = smul.u32 2, %s11
          %p112 = scmp.lt.s32.totalorder %s111, 3
          %s113 = scalar_select %p112, %s111, 3
          %s114 = smul.addr %s113, 8
          %s115 = scalar_lea.vmem %s0, %s114
          %s116 = smul.u32 2, %s11
        $region20: #{tpu_custom_call.1} parent=15 // pred_fallthru
          _
        // Predicated region
        $region21: #{tpu_custom_call.1} parent=15 // pred_check
          %p117 = pneg %p57
        $region22: #{tpu_custom_call.1} parent=15 // pred_check_branch
          %119 = sbr.rel (%p117) target = $region24
        $region23: #{tpu_custom_call.1} parent=15 // pred_region
          %s120 = smul.u32 2, %s11
          %p121 = scmp.lt.s32.totalorder %s120, 3
          %s122 = scalar_select %p121, %s120, 3
          %s123 = smul.addr %s122, 8
          %s124 = scalar_lea.vmem %s1, %s123
          %s125 = smul.u32 2, %s11
        $region24: #{tpu_custom_call.1} parent=15 // pred_fallthru
          _
      $region16: #{tpu_custom_call.1} parent=5 // pred_fallthru
        _
      %p126 = scmp.le.s32.totalorder 1, %s11
      %p127 = scmp.lt.s32.totalorder %s11, 3
      %p128 = pnand %p126, %p127
      %p129 = pneg %p128
      // Predicated region
      $region25: #{tpu_custom_call.1} parent=5 // pred_check
        _
      $region26: #{tpu_custom_call.1} parent=5 // pred_check_branch
        %131 = sbr.rel (%p128) target = $region28
      $region27: #{tpu_custom_call.1} parent=5 // pred_region
        %s132 = ssub.s32 %s11, 1
        %s133 = smul.u32 2, %s16
        %p134 = scmp.lt.s32.totalorder %s133, 3
        %s135 = scalar_select %p134, %s133, 3
        %s136 = smul.addr %s135, 8
        %s137 = scalar_lea.vmem %s0, %s136
        %p138 = pneg %p37
        %p139 = pneg %p34
        %s140 = smul.u32 2, %s16
        %p141 = scmp.lt.s32.totalorder %s140, 3
        %s142 = scalar_select %p141, %s140, 3
        %s143 = smul.addr %s142, 8
        %s144 = scalar_lea.vmem %s1, %s143
        %p145 = pneg %p63
        %p146 = pneg %p60
        %p147 = pneg %p89
        %p148 = pneg %p86
        %s149 = sand.u32 %s76, 1
        %s150 = scalar_lea.sflag [#allocation3], %s149
        %s151 = sand.u32 %s76, 1
        %s152 = smul.addr %s151, 8
        %s153 = scalar_lea.vmem [#allocation2], %s152
        %s154 = smul.u32 2, %s16
        %p155 = scmp.lt.s32.totalorder %s154, 3
        %s156 = scalar_select %p155, %s154, 3
        %s157 = smul.addr %s156, 8
        %s158 = scalar_lea.vmem %s0, %s157
        %s159 = smul.u32 2, %s16
        %s160 = smul.u32 2, %s16
        %p161 = scmp.lt.s32.totalorder %s160, 3
        %s162 = scalar_select %p161, %s160, 3
        %s163 = smul.addr %s162, 8
        %s164 = scalar_lea.vmem %s1, %s163
        %s165 = smul.u32 2, %s16
        %s166 = smul.u32 %s16, 16
        %v167 = vld [vmem:[%s158] sm:$0xff]
        %v168 = vld [vmem:[%s158 + $0x8] sm:$0xff]
        %v169 = vld [vmem:[%s164] sm:$0xff]
        %v170 = vld [vmem:[%s164 + $0x8] sm:$0xff]
        %171 = vmax.xlane.f32.xlu0 %v167
        %v172 = vpop.xlane.xlu0 %171
        %173 = vmax.xlane.f32.xlu0 %v168
        %v174 = vpop.xlane.xlu0 %173
        %v175 = vsub.f32 %v167, %v172
        %v176 = vsub.f32 %v168, %v174
        %v177 = vmul.f32 %v175, 1.442695
        %v178 = vpow.pop %v177
        %v179 = vmul.f32 %v176, 1.442695
        %v180 = vpow.pop %v179
        %181 = vadd.xlane.f32.xlu0 %v178
        %v182 = vpop.xlane.xlu0 %181
        %183 = vadd.xlane.f32.xlu0 %v180
        %v184 = vpop.xlane.xlu0 %183
        %v185 = vlaneseq
        %v186 = vand.u32 %v185, 127
        %187 = vset.pattern.permute.xlu0 0
        %188 = vperm.xlu0 %187, %v169
        %v189 = vpop.permute.xlu0 %188
        %190 = vset.pattern.permute.xlu0 0
        %191 = vperm.xlu0 %190, %v170
        %v192 = vpop.permute.xlu0 %191
        %vm193 = vcmp.eq.s32.totalorder %v186, %v189
        %vm194 = vcmp.eq.s32.totalorder %v186, %v192
        %v195 = vsel %vm193, %v175, 0.0
        %v196 = vsel %vm194, %v176, 0.0
        %197 = vadd.xlane.f32.xlu0 %v195
        %v198 = vpop.xlane.xlu0 %197
        %199 = vadd.xlane.f32.xlu0 %v196
        %v200 = vpop.xlane.xlu0 %199
        %v201 = vlog2.pop %v182
        %v202 = vmul.f32 %v201, 0.6931472
        %v203 = vlog2.pop %v184
        %v204 = vmul.f32 %v203, 0.6931472
        %v205 = vsub.f32 %v202, %v198
        %v206 = vsub.f32 %v204, %v200
        %v207 = vlaneseq
        %v208 = vshrl.u32 %v207, 7
        %v209 = vadd.s32 %v208, 8
        %v210 = vstv %s166
        %v211 = vadd.s32 %v210, %v208
        %v212 = vadd.s32 %v210, %v209
        %vm213 = vcmp.lt.s32.totalorder %v211, 32
        %vm214 = vcmp.lt.s32.totalorder %v212, 32
        %v215 = vsel %vm213, %v205, 0.0
        %v216 = vsel %vm214, %v206, 0.0
        %vm217 = vcmask 7168
        %v218 = vsel %vm217, %v215, 0.0
        %v219 = vsel %vm217, %v216, 0.0
        %v220 = vadd.f32 %v218, %v219
        %221 = vadd.xlane.f32.xlu0 %v220
        %v222 = vpop.xlane.xlu0 %221
        %v223 = vrot.slane %v222, 4
        %v224 = vadd.f32 %v222, %v223
        %v225 = vrot.slane %v224, 2
        %v226 = vadd.f32 %v224, %v225
        %v227 = vrot.slane %v226, 1
        %v228 = vadd.f32 %v226, %v227
        %s229 = vtos %v228
        %vm230 = vcmp.eq.s32.totalorder %v208, 0
        %vm231 = vcmp.eq.s32.totalorder %v186, 0
        %vm232 = vmand %vm230, %vm231
        %v233 = vstv %s229
        %v234 = vsel %vm232, %v233, 0.0
        %235 = vst [vmem:[%s153] sm:$0xff] %v234
        %s236 = sand.u32 %s76, 1
        %s237 = scalar_lea.sflag [#allocation3], %s236
        %s238 = sand.u32 %s76, 1
        %s239 = smul.addr %s238, 8
        %s240 = scalar_lea.vmem [#allocation2], %s239
        // Predicated region
        $region29: #{tpu_custom_call.1} parent=27 // pred_check
          %p241 = pneg %p86
        $region30: #{tpu_custom_call.1} parent=27 // pred_check_branch
          %243 = sbr.rel (%p241) target = $region32
        $region31: #{tpu_custom_call.1} parent=27 // pred_region
          %245 = vsyncadd %s237, 0
          %s246 = smul.addr %s16, 8
          %s247 = scalar_lea.hbm %s2, %s246
          %s249 = sshll.u32 %s240, 4
          %s250 = int_to_ptr.vmem [resolvable:$true] %s249
          %s251 = sshll.u32 %s247, 4
          %s252 = int_to_ptr.hbm [resolvable:$true] %s251
          %254 = dma.vmem_to_hbm [thread:$0]  %s250, 128, %s252, %s237
        $region32: #{tpu_custom_call.1} parent=27 // pred_fallthru
          _
      $region28: #{tpu_custom_call.1} parent=5 // pred_fallthru
        _
      %p255 = scmp.le.s32.totalorder 2, %s11
      // Predicated region
      $region33: #{tpu_custom_call.1} parent=5 // pred_check
        %p256 = pneg %p255
      $region34: #{tpu_custom_call.1} parent=5 // pred_check_branch
        %258 = sbr.rel (%p256) target = $region36
      $region35: #{tpu_custom_call.1} parent=5 // pred_region
        %s259 = ssub.s32 %s11, 2
        // Predicated region
        $region37: #{tpu_custom_call.1} parent=35 // pred_check
          %p260 = pneg %p92
        $region38: #{tpu_custom_call.1} parent=35 // pred_check_branch
          %262 = sbr.rel (%p260) target = $region40
        $region39: #{tpu_custom_call.1} parent=35 // pred_region
          %s263 = sand.u32 %s77, 1
          %s264 = scalar_lea.sflag [#allocation3], %s263
          %s265 = sand.u32 %s77, 1
          %s266 = smul.addr %s265, 8
          %s267 = scalar_lea.vmem [#allocation2], %s266
          %269 = dma.done %s264, 128
        $region40: #{tpu_custom_call.1} parent=35 // pred_fallthru
          _
      $region36: #{tpu_custom_call.1} parent=5 // pred_fallthru
        _
    $region6: #{tpu_custom_call.1} parent=1 // loop_footer
      %s15 = sadd.s32 1, %s11
    $region7: #{tpu_custom_call.1} parent=1 // loop_footer_branch
      %10 = sbr.rel target = $region3
    $region8: #{tpu_custom_call.1} parent=1 // loop_exit
      _
    %270 = vsyncpa [#allocation3], 1
    %s271 = scalar_lea.sflag [#allocation3], 1
    %272 = vsyncpa %s271, 1

</llo_original>
